<compile_context>
chip_gen: v7x
topology: tpu7x:2x2x1
jax: 0.10.0
libtpu: 0.0.40
codegen_flags: <defaults>
</compile_context>

<pallas_src>
import jax
import jax.numpy as jnp
from jax.experimental import pallas as pl
from jax.experimental.pallas import tpu as pltpu

HIDDEN = 256


def _critic_kernel(x_ref, a_ref, w1o_ref, w1a_ref, b1_ref,
                   w2_ref, b2_ref, w3_ref, b3_ref, o_ref):
    # ---- fc1 (concat fused): x @ W1_obs + a @ W1_act + b1  (bf16 MXU, f32 acc)
    xb = x_ref[...].astype(jnp.bfloat16)
    ab = a_ref[...].astype(jnp.bfloat16)
    h1 = (jnp.dot(xb, w1o_ref[...], preferred_element_type=jnp.float32)
          + jnp.dot(ab, w1a_ref[...], preferred_element_type=jnp.float32)
          + b1_ref[...])
    h1 = jnp.maximum(h1, 0.0).astype(jnp.bfloat16)  # f32 epilogue, bf16 for next MXU pass

    # ---- fc2
    h2 = jnp.dot(h1, w2_ref[...], preferred_element_type=jnp.float32) + b2_ref[...]
    h2 = jnp.maximum(h2, 0.0)                       # keep f32 (v5e VPU has no bf16)

    # ---- fc3 (256 -> 1): VPU multiply + lane reduction, no wasted N=1 MXU pass
    out = jnp.sum(h2 * w3_ref[...], axis=-1, keepdims=True) + b3_ref[...]
    o_ref[...] = out.astype(o_ref.dtype)


def _round_up(n, m):
    return (n + m - 1) // m * m


def critic_forward(x, a, params, *, tb_max=256):
    """Fused CriticNet forward.  x: [B, obs_dim], a: [B, act_dim] -> [B, 1]."""
    w1o, w1a, b1, w2, b2, w3, b3 = params
    B, obs_dim = x.shape
    act_dim = a.shape[1]
    hidden = w2.shape[0]
    d_in = obs_dim + act_dim

    # Batch tile: multiple of 8 (sublane), capped at 256 (MXU M dim on v6e/v7x).
    TB = min(tb_max, _round_up(B, 8))
    B_pad = _round_up(B, TB)
    if B_pad != B:
        x = jnp.pad(x, ((0, B_pad - B), (0, 0)))
        a = jnp.pad(a, ((0, B_pad - B), (0, 0)))
    grid = (B_pad // TB,)

    batched = lambda shape: pl.BlockSpec(shape, lambda i: (0, 0))  # weights: VMEM-resident
    flops = 2 * B_pad * (d_in * hidden + hidden * hidden + hidden)
    bytes_accessed = (x.size * 4 + a.size * 4
                      + (w1o.size + w1a.size + w2.size) * 2
                      + (b1.size + b2.size + w3.size + b3.size) * 4
                      + B_pad * 4)

    out = pl.pallas_call(
        _critic_kernel,
        out_shape=jax.ShapeDtypeStruct((B_pad, 1), jnp.float32),
        grid_spec=pltpu.PrefetchScalarGridSpec(
            num_scalar_prefetch=0,
            grid=grid,
            in_specs=[
                pl.BlockSpec((TB, obs_dim), lambda i: (i, 0)),
                pl.BlockSpec((TB, act_dim), lambda i: (i, 0)),
                batched((obs_dim, hidden)),   # w1_obs (bf16)
                batched((act_dim, hidden)),   # w1_act (bf16)
                batched((1, hidden)),         # b1 (f32)
                batched((hidden, hidden)),    # w2 (bf16)
                batched((1, hidden)),         # b2 (f32)
                batched((1, hidden)),         # w3 row (f32, VPU epilogue)
                batched((1, 1)),              # b3 (f32)
            ],
            out_specs=pl.BlockSpec((TB, 1), lambda i: (i, 0)),
        ),
        compiler_params=pltpu.CompilerParams(
            dimension_semantics=("parallel",)),
        cost_estimate=pl.CostEstimate(
            flops=flops, transcendentals=0, bytes_accessed=bytes_accessed),
    )(x, a, w1o, w1a, b1, w2, b2, w3, b3)

    return out[:B]


def init_params(key, obs_dim, act_dim, hidden=HIDDEN):
    """nn.Linear-style init (uniform +/- 1/sqrt(fan_in)).

    fc1's weight is split across the concat boundary and stored as
    [in, out] (pre-transposed); MXU-operand weights are bf16, biases and the
    final 256->1 row (VPU path) stay f32.
    """
    d_in = obs_dim + act_dim
    ks = jax.random.split(key, 6)

    def linear(kw, kb, fan_in, fan_out):
        bound = 1.0 / jnp.sqrt(jnp.float32(fan_in))
        w = jax.random.uniform(kw, (fan_in, fan_out), jnp.float32, -bound, bound)
        b = jax.random.uniform(kb, (1, fan_out), jnp.float32, -bound, bound)
        return w, b

    w1, b1 = linear(ks[0], ks[1], d_in, hidden)
    w2, b2 = linear(ks[2], ks[3], hidden, hidden)
    w3, b3 = linear(ks[4], ks[5], hidden, 1)

    w1_obs = w1[:obs_dim].astype(jnp.bfloat16)
    w1_act = w1[obs_dim:].astype(jnp.bfloat16)
    w2 = w2.astype(jnp.bfloat16)
    w3_row = w3.T  # [1, hidden], f32
    return (w1_obs, w1_act, b1, w2, b2, w3_row, b3)


def critic_forward_ref(x, a, params):
    """Pure-JAX reference with identical numerics (bf16 operands, f32 acc)."""
    w1o, w1a, b1, w2, b2, w3, b3 = params
    xb = x.astype(jnp.bfloat16)
    ab = a.astype(jnp.bfloat16)
    h1 = (jnp.dot(xb, w1o, preferred_element_type=jnp.float32)
          + jnp.dot(ab, w1a, preferred_element_type=jnp.float32) + b1)
    h1 = jnp.maximum(h1, 0.0).astype(jnp.bfloat16)
    h2 = jnp.dot(h1, w2, preferred_element_type=jnp.float32) + b2
    h2 = jnp.maximum(h2, 0.0)
    return jnp.sum(h2 * w3, axis=-1, keepdims=True) + b3


if __name__ == "__main__":
    key = jax.random.PRNGKey(0)
    k_x, k_a, k_p = jax.random.split(key, 3)

    B, OBS, ACT = 2, 24, 8  # small DDPG-style critic shapes
    x = jax.random.normal(k_x, (B, OBS), jnp.float32)
    a = jax.random.normal(k_a, (B, ACT), jnp.float32)
    params = init_params(k_p, OBS, ACT, hidden=HIDDEN)

    out = jax.block_until_ready(critic_forward(x, a, params))
    ref = critic_forward_ref(x, a, params)
    assert out.shape == (B, 1), out.shape
    assert jnp.allclose(out, ref, atol=1e-3, rtol=1e-3), (out, ref)

    # Exercise the batch-tiled grid path (multiple tiles + padding).
    B2 = 1000
    x2 = jax.random.normal(k_x, (B2, OBS), jnp.float32)
    a2 = jax.random.normal(k_a, (B2, ACT), jnp.float32)
    out2 = jax.block_until_ready(critic_forward(x2, a2, params))
    ref2 = critic_forward_ref(x2, a2, params)
    assert out2.shape == (B2, 1), out2.shape
    assert jnp.allclose(out2, ref2, atol=1e-3, rtol=1e-3)

    print("KERNEL_OK")
</pallas_src>

<mosaic_0001>
module attributes {stable_mosaic.version = 11 : i64} {
  func.func @_critic_kernel(%arg0: i32, %arg1: memref<8x24xf32, #tpu.memory_space<vmem>>, %arg2: memref<8x8xf32, #tpu.memory_space<vmem>>, %arg3: memref<24x256xbf16, #tpu.memory_space<vmem>>, %arg4: memref<8x256xbf16, #tpu.memory_space<vmem>>, %arg5: memref<1x256xf32, #tpu.memory_space<vmem>>, %arg6: memref<256x256xbf16, #tpu.memory_space<vmem>>, %arg7: memref<1x256xf32, #tpu.memory_space<vmem>>, %arg8: memref<1x256xf32, #tpu.memory_space<vmem>>, %arg9: memref<1x1xf32, #tpu.memory_space<vmem>>, %arg10: memref<8x1xf32, #tpu.memory_space<vmem>>) attributes {dimension_semantics = [#tpu.dimension_semantics<parallel>], iteration_bounds = array<i64: 1>, scalar_prefetch = 0 : i64, scratch_operands = 0 : i64, tpu.core_type = #tpu.core_type<tc>, window_params = [{transform_indices = @transform_0, window_bounds = array<i64: 8, 24>}, {transform_indices = @transform_1, window_bounds = array<i64: 8, 8>}, {pipeline_mode = #tpu.pipeline_mode<synchronous>, transform_indices = @transform_2, window_bounds = array<i64: 24, 256>}, {pipeline_mode = #tpu.pipeline_mode<synchronous>, transform_indices = @transform_3, window_bounds = array<i64: 8, 256>}, {pipeline_mode = #tpu.pipeline_mode<synchronous>, transform_indices = @transform_4, window_bounds = array<i64: 1, 256>}, {pipeline_mode = #tpu.pipeline_mode<synchronous>, transform_indices = @transform_5, window_bounds = array<i64: 256, 256>}, {pipeline_mode = #tpu.pipeline_mode<synchronous>, transform_indices = @transform_6, window_bounds = array<i64: 1, 256>}, {pipeline_mode = #tpu.pipeline_mode<synchronous>, transform_indices = @transform_7, window_bounds = array<i64: 1, 256>}, {pipeline_mode = #tpu.pipeline_mode<synchronous>, transform_indices = @transform_8, window_bounds = array<i64: 1, 1>}, {transform_indices = @transform_9, window_bounds = array<i64: 8, 1>}]} {
    %c0 = arith.constant 0 : index
    %c0_0 = arith.constant 0 : index
    %0 = vector.load %arg1[%c0, %c0_0] : memref<8x24xf32, #tpu.memory_space<vmem>>, vector<8x24xf32>
    %1 = arith.truncf %0 : vector<8x24xf32> to vector<8x24xbf16>
    %c0_1 = arith.constant 0 : index
    %c0_2 = arith.constant 0 : index
    %2 = vector.load %arg2[%c0_1, %c0_2] : memref<8x8xf32, #tpu.memory_space<vmem>>, vector<8x8xf32>
    %3 = arith.truncf %2 : vector<8x8xf32> to vector<8x8xbf16>
    %c0_3 = arith.constant 0 : index
    %c0_4 = arith.constant 0 : index
    %4 = vector.load %arg3[%c0_3, %c0_4] : memref<24x256xbf16, #tpu.memory_space<vmem>>, vector<24x256xbf16>
    %cst = arith.constant dense<0.000000e+00> : vector<8x256xf32>
    %5 = tpu.matmul %1, %4, %cst {dimension_numbers = #tpu.dot_dimension_numbers<[1], [0], [0], [1], [0, 0, 1, 1], [], []>} : vector<8x24xbf16>, vector<24x256xbf16>, vector<8x256xf32> -> vector<8x256xf32>
    %c0_5 = arith.constant 0 : index
    %c0_6 = arith.constant 0 : index
    %6 = vector.load %arg4[%c0_5, %c0_6] : memref<8x256xbf16, #tpu.memory_space<vmem>>, vector<8x256xbf16>
    %cst_7 = arith.constant dense<0.000000e+00> : vector<8x256xf32>
    %7 = tpu.matmul %3, %6, %cst_7 {dimension_numbers = #tpu.dot_dimension_numbers<[1], [0], [0], [1], [0, 0, 1, 1], [], []>} : vector<8x8xbf16>, vector<8x256xbf16>, vector<8x256xf32> -> vector<8x256xf32>
    %8 = arith.addf %5, %7 : vector<8x256xf32>
    %c0_8 = arith.constant 0 : index
    %c0_9 = arith.constant 0 : index
    %9 = vector.load %arg5[%c0_8, %c0_9] : memref<1x256xf32, #tpu.memory_space<vmem>>, vector<1x256xf32>
    %10 = vector.broadcast %9 : vector<1x256xf32> to vector<8x256xf32>
    %11 = arith.addf %8, %10 : vector<8x256xf32>
    %cst_10 = arith.constant 0.000000e+00 : f32
    %12 = vector.broadcast %cst_10 : f32 to vector<8x256xf32>
    %13 = arith.maximumf %11, %12 : vector<8x256xf32>
    %14 = arith.truncf %13 : vector<8x256xf32> to vector<8x256xbf16>
    %c0_11 = arith.constant 0 : index
    %c0_12 = arith.constant 0 : index
    %15 = vector.load %arg6[%c0_11, %c0_12] : memref<256x256xbf16, #tpu.memory_space<vmem>>, vector<256x256xbf16>
    %cst_13 = arith.constant dense<0.000000e+00> : vector<8x256xf32>
    %16 = tpu.matmul %14, %15, %cst_13 {dimension_numbers = #tpu.dot_dimension_numbers<[1], [0], [0], [1], [0, 0, 1, 1], [], []>} : vector<8x256xbf16>, vector<256x256xbf16>, vector<8x256xf32> -> vector<8x256xf32>
    %c0_14 = arith.constant 0 : index
    %c0_15 = arith.constant 0 : index
    %17 = vector.load %arg7[%c0_14, %c0_15] : memref<1x256xf32, #tpu.memory_space<vmem>>, vector<1x256xf32>
    %18 = vector.broadcast %17 : vector<1x256xf32> to vector<8x256xf32>
    %19 = arith.addf %16, %18 : vector<8x256xf32>
    %cst_16 = arith.constant 0.000000e+00 : f32
    %20 = vector.broadcast %cst_16 : f32 to vector<8x256xf32>
    %21 = arith.maximumf %19, %20 : vector<8x256xf32>
    %c0_17 = arith.constant 0 : index
    %c0_18 = arith.constant 0 : index
    %22 = vector.load %arg8[%c0_17, %c0_18] : memref<1x256xf32, #tpu.memory_space<vmem>>, vector<1x256xf32>
    %23 = vector.broadcast %22 : vector<1x256xf32> to vector<8x256xf32>
    %24 = arith.mulf %21, %23 : vector<8x256xf32>
    %cst_19 = arith.constant dense<0.000000e+00> : vector<8xf32>
    %25 = vector.multi_reduction <add>, %24, %cst_19 [1] : vector<8x256xf32> to vector<8xf32>
    %26 = vector.shape_cast %25 : vector<8xf32> to vector<8x1xf32>
    %c0_20 = arith.constant 0 : index
    %c0_21 = arith.constant 0 : index
    %27 = vector.load %arg9[%c0_20, %c0_21] : memref<1x1xf32, #tpu.memory_space<vmem>>, vector<1x1xf32>
    %28 = vector.broadcast %27 : vector<1x1xf32> to vector<8x1xf32>
    %29 = arith.addf %26, %28 : vector<8x1xf32>
    %c0_22 = arith.constant 0 : index
    %c0_23 = arith.constant 0 : index
    %30 = vector.load %arg10[%c0_22, %c0_23] : memref<8x1xf32, #tpu.memory_space<vmem>>, vector<8x1xf32>
    tpu.vector_store %arg10[%c0_22, %c0_23], %29 {strides = array<i32>} : memref<8x1xf32, #tpu.memory_space<vmem>>, vector<8x1xf32>,
    return
  }
  func.func @transform_0(%arg0: i32) -> (i32, i32) {
    %c0_i32 = arith.constant 0 : i32
    %c0_i32_0 = arith.constant 0 : i32
    return %arg0, %c0_i32 : i32, i32
  }
  func.func @transform_1(%arg0: i32) -> (i32, i32) {
    %c0_i32 = arith.constant 0 : i32
    %c0_i32_0 = arith.constant 0 : i32
    return %arg0, %c0_i32 : i32, i32
  }
  func.func @transform_2(%arg0: i32) -> (i32, i32) {
    %c0_i32 = arith.constant 0 : i32
    %c0_i32_0 = arith.constant 0 : i32
    %c0_i32_1 = arith.constant 0 : i32
    return %c0_i32, %c0_i32_0 : i32, i32
  }
  func.func @transform_3(%arg0: i32) -> (i32, i32) {
    %c0_i32 = arith.constant 0 : i32
    %c0_i32_0 = arith.constant 0 : i32
    %c0_i32_1 = arith.constant 0 : i32
    return %c0_i32, %c0_i32_0 : i32, i32
  }
  func.func @transform_4(%arg0: i32) -> (i32, i32) {
    %c0_i32 = arith.constant 0 : i32
    %c0_i32_0 = arith.constant 0 : i32
    %c0_i32_1 = arith.constant 0 : i32
    return %c0_i32, %c0_i32_0 : i32, i32
  }
  func.func @transform_5(%arg0: i32) -> (i32, i32) {
    %c0_i32 = arith.constant 0 : i32
    %c0_i32_0 = arith.constant 0 : i32
    %c0_i32_1 = arith.constant 0 : i32
    return %c0_i32, %c0_i32_0 : i32, i32
  }
  func.func @transform_6(%arg0: i32) -> (i32, i32) {
    %c0_i32 = arith.constant 0 : i32
    %c0_i32_0 = arith.constant 0 : i32
    %c0_i32_1 = arith.constant 0 : i32
    return %c0_i32, %c0_i32_0 : i32, i32
  }
  func.func @transform_7(%arg0: i32) -> (i32, i32) {
    %c0_i32 = arith.constant 0 : i32
    %c0_i32_0 = arith.constant 0 : i32
    %c0_i32_1 = arith.constant 0 : i32
    return %c0_i32, %c0_i32_0 : i32, i32
  }
  func.func @transform_8(%arg0: i32) -> (i32, i32) {
    %c0_i32 = arith.constant 0 : i32
    %c0_i32_0 = arith.constant 0 : i32
    %c0_i32_1 = arith.constant 0 : i32
    return %c0_i32, %c0_i32_0 : i32, i32
  }
  func.func @transform_9(%arg0: i32) -> (i32, i32) {
    %c0_i32 = arith.constant 0 : i32
    %c0_i32_0 = arith.constant 0 : i32
    return %arg0, %c0_i32 : i32, i32
  }
}

</mosaic_0001>

<llo_original>
// kernel: tpu_custom_call.1
$region0: #{tpu_custom_call.1}
  #allocation0 [shape = 'u32[]', space=smem, size = 0x4, offset = 0x4, fixed_abs, tag = 'smem constant byte address 0x4 - core index']
  #allocation1 [shape = 'u32[144,128]{1,0:T(1,128)}', space=vmem, size = 0x12000, scoped, tag = 'internal scratch']
  #allocation2 [shape = 'f32[1,1]{1,0:T(1,128)S(1)}', space=vmem, size = 0x200, scoped, tag = 'scoped memory for tpu_custom_call.1']
  %s0 = inlined_call_operand.hbm [shape: f32[8,24], index: 0, kind: input, shape index: {}]
  %s1 = inlined_call_operand.hbm [shape: f32[8,8], index: 1, kind: input, shape index: {}]
  %s2 = inlined_call_operand.hbm [shape: bf16[24,256], index: 2, kind: input, shape index: {}]
  %s3 = inlined_call_operand.vmem [shape: bf16[8,256], index: 3, kind: input, shape index: {}]
  %s4 = inlined_call_operand.vmem [shape: f32[1,256], index: 4, kind: input, shape index: {}]
  %s5 = inlined_call_operand.hbm [shape: bf16[256,256], index: 5, kind: input, shape index: {}]
  %s6 = inlined_call_operand.vmem [shape: f32[1,256], index: 6, kind: input, shape index: {}]
  %s7 = inlined_call_operand.vmem [shape: f32[1,256], index: 7, kind: input, shape index: {}]
  %s8 = inlined_call_operand.<no memory space> [shape: f32[1,1], index: 8, kind: input, shape index: {}]
  %s9 = inlined_call_operand.vmem [shape: f32[8,1], index: 9, kind: output, shape index: {}]
  %s10 = sld [smem:[#allocation0]]
  $region62: #{tpu_custom_call.1} parent=0
    _
  %s12 = ssub.s32 1, %s10
  %s13 = scalar_select 0, %s12, %s10
  %v14 = vstv %s8
  %15 = vst [vmem:[#allocation2] sm:$0x1] %v14
  $region1: #{tpu_custom_call.1} parent=0
    #allocation3 [shape = 'u8[4096]{0}', space=vmem, size = 0x1000, scoped, tag = 'input window, operand 0, single buffered']
    #allocation4 [shape = 's32[1]{0}', space=sflag, size = 0x4, scoped, tag = 'scoped memory for tpu_custom_call.1']
    #allocation5 [shape = 'u8[4096]{0}', space=vmem, size = 0x1000, scoped, tag = 'input window, operand 1, single buffered']
    #allocation6 [shape = 's32[1]{0}', space=sflag, size = 0x4, scoped, tag = 'scoped memory for tpu_custom_call.1']
    #allocation7 [shape = 'u8[12288]{0}', space=vmem, size = 0x3000, scoped, tag = 'input window, operand 2, single buffered']
    #allocation8 [shape = 'u8[131072]{0}', space=vmem, size = 0x20000, scoped, tag = 'input window, operand 5, single buffered']
    #allocation9 [shape = 's32[1]{0}', space=sflag, size = 0x4, scoped, tag = 'scoped memory for tpu_custom_call.1']
    %16 = vsyncpa [#allocation4], 0
    %17 = vsyncpa [#allocation6], 0
    %18 = vsyncpa [#allocation9], 0
    // Predicated region
    $region2: #{tpu_custom_call.1} parent=1 // pred_check
      _
    $region3: #{tpu_custom_call.1} parent=1 // pred_check_branch
      %20 = sbr.rel (0) target = $region5
    $region4: #{tpu_custom_call.1} parent=1 // pred_region
      %s22 = ssub.s32 128, 128
      %23 = vsyncadd [#allocation4], %s22
      %s25 = sshll.u32 [#allocation3], 4
      %s26 = int_to_ptr.vmem [resolvable:$true] %s25
      %28 = dma.hbm_to_vmem [thread:$0]  %s0, 128, %s26, [#allocation4]
    $region5: #{tpu_custom_call.1} parent=1 // pred_fallthru
      _
    // Predicated region
    $region6: #{tpu_custom_call.1} parent=1 // pred_check
      _
    $region7: #{tpu_custom_call.1} parent=1 // pred_check_branch
      %30 = sbr.rel (0) target = $region9
    $region8: #{tpu_custom_call.1} parent=1 // pred_region
      %s32 = ssub.s32 128, 128
      %33 = vsyncadd [#allocation6], %s32
      %s35 = sshll.u32 [#allocation5], 4
      %s36 = int_to_ptr.vmem [resolvable:$true] %s35
      %38 = dma.hbm_to_vmem [thread:$0]  %s1, 128, %s36, [#allocation6]
    $region9: #{tpu_custom_call.1} parent=1 // pred_fallthru
      _
    // Predicated region
    $region10: #{tpu_custom_call.1} parent=1 // pred_check
      _
    $region11: #{tpu_custom_call.1} parent=1 // pred_check_branch
      %40 = sbr.rel (0) target = $region13
    $region12: #{tpu_custom_call.1} parent=1 // pred_region
      %s42 = ssub.s32 384, 384
      %43 = vsyncadd [#allocation6], %s42
      %s44 = sshll.u32 [#allocation7], 4
      %s45 = int_to_ptr.vmem [resolvable:$true] %s44
      %50 = dma.hbm_to_vmem [thread:$0]  %s2, 384, %s45, [#allocation6], 128, 128, 8
    $region13: #{tpu_custom_call.1} parent=1 // pred_fallthru
      _
    // Predicated region
    $region14: #{tpu_custom_call.1} parent=1 // pred_check
      _
    $region15: #{tpu_custom_call.1} parent=1 // pred_check_branch
      %52 = sbr.rel (0) target = $region17
    $region16: #{tpu_custom_call.1} parent=1 // pred_region
      _
    $region17: #{tpu_custom_call.1} parent=1 // pred_fallthru
      _
    // Predicated region
    $region18: #{tpu_custom_call.1} parent=1 // pred_check
      _
    $region19: #{tpu_custom_call.1} parent=1 // pred_check_branch
      %54 = sbr.rel (0) target = $region21
    $region20: #{tpu_custom_call.1} parent=1 // pred_region
      _
    $region21: #{tpu_custom_call.1} parent=1 // pred_fallthru
      _
    // Predicated region
    $region22: #{tpu_custom_call.1} parent=1 // pred_check
      _
    $region23: #{tpu_custom_call.1} parent=1 // pred_check_branch
      %56 = sbr.rel (0) target = $region25
    $region24: #{tpu_custom_call.1} parent=1 // pred_region
      %s58 = ssub.s32 4096, 4096
      %59 = vsyncadd [#allocation9], %s58
      %s60 = sshll.u32 [#allocation8], 4
      %s61 = int_to_ptr.vmem [resolvable:$true] %s60
      %66 = dma.hbm_to_vmem [thread:$0]  %s5, 4096, %s61, [#allocation9], 128, 128, 8
    $region25: #{tpu_custom_call.1} parent=1 // pred_fallthru
      _
    // Predicated region
    $region26: #{tpu_custom_call.1} parent=1 // pred_check
      _
    $region27: #{tpu_custom_call.1} parent=1 // pred_check_branch
      %68 = sbr.rel (0) target = $region29
    $region28: #{tpu_custom_call.1} parent=1 // pred_region
      _
    $region29: #{tpu_custom_call.1} parent=1 // pred_fallthru
      _
    // Predicated region
    $region30: #{tpu_custom_call.1} parent=1 // pred_check
      _
    $region31: #{tpu_custom_call.1} parent=1 // pred_check_branch
      %70 = sbr.rel (0) target = $region33
    $region32: #{tpu_custom_call.1} parent=1 // pred_region
      _
    $region33: #{tpu_custom_call.1} parent=1 // pred_fallthru
      _
    // Predicated region
    $region34: #{tpu_custom_call.1} parent=1 // pred_check
      _
    $region35: #{tpu_custom_call.1} parent=1 // pred_check_branch
      %72 = sbr.rel (0) target = $region37
    $region36: #{tpu_custom_call.1} parent=1 // pred_region
      _
    $region37: #{tpu_custom_call.1} parent=1 // pred_fallthru
      _
    // Predicated region
    $region38: #{tpu_custom_call.1} parent=1 // pred_check
      _
    $region39: #{tpu_custom_call.1} parent=1 // pred_check_branch
      %74 = sbr.rel (0) target = $region41
    $region40: #{tpu_custom_call.1} parent=1 // pred_region
      %75 = dma.done [#allocation4], 128
    $region41: #{tpu_custom_call.1} parent=1 // pred_fallthru
      _
    // Predicated region
    $region42: #{tpu_custom_call.1} parent=1 // pred_check
      _
    $region43: #{tpu_custom_call.1} parent=1 // pred_check_branch
      %77 = sbr.rel (0) target = $region45
    $region44: #{tpu_custom_call.1} parent=1 // pred_region
      %78 = dma.done [#allocation6], 128
    $region45: #{tpu_custom_call.1} parent=1 // pred_fallthru
      _
    // Predicated region
    $region46: #{tpu_custom_call.1} parent=1 // pred_check
      _
    $region47: #{tpu_custom_call.1} parent=1 // pred_check_branch
      %80 = sbr.rel (0) target = $region49
    $region48: #{tpu_custom_call.1} parent=1 // pred_region
      %81 = dma.done [#allocation6], 384
    $region49: #{tpu_custom_call.1} parent=1 // pred_fallthru
      _
    // Predicated region
    $region50: #{tpu_custom_call.1} parent=1 // pred_check
      _
    $region51: #{tpu_custom_call.1} parent=1 // pred_check_branch
      %83 = sbr.rel (0) target = $region53
    $region52: #{tpu_custom_call.1} parent=1 // pred_region
      %84 = dma.done [#allocation9], 4096
    $region53: #{tpu_custom_call.1} parent=1 // pred_fallthru
      _
    %v86 = vld [vmem:[#allocation3] sm:$0xff]
    %v87 = vpack.c.bf16 %v86, %v86
    %v88 = vld [vmem:[#allocation5] sm:$0xff]
    %v89 = vpack.c.bf16 %v88, %v88
    %v90 = vld [vmem:[#allocation7] sm:$0xff]
    %v91 = vld [vmem:[#allocation7 + $0x8] sm:$0xff]
    %v92 = vld [vmem:[#allocation7 + $0x10] sm:$0xff]
    %v93 = vld [vmem:[%s3] sm:$0xff]
    %v95 = vunpack.c.l.b16 %v93
    %v96 = vunpack.c.h.b16 %v93
    %v97 = vpack.c.b16 %v95, %v95
    %v98 = vpack.c.b16 %v96, %v96
    %vm99 = vcmask 64512
    %v101 = vsel %vm99, %v89, 0
    %vm103 = vcmask 1043456
    %v105 = vsel %vm103, %v97, 0
    %v108 = vsel %vm103, %v98, 0
    %110 = vmatprep.subr.bf16.mxu0 %v108
    %111 = vmatpush1.bf16.msra.mxu0 %v105
    %112 = vmatprep.subr.bf16.mxu0 0
    %113 = vmatpush1.bf16.msra.mxu0 0
    %114 = vmatprep.subr.bf16.mxu0 0
    %115 = vmatpush1.bf16.msra.mxu0 0
    %116 = vmatprep.subr.bf16.mxu0 0
    %117 = vmatpush1.bf16.msra.mxu0 0
    %118 = vmatprep.subr.bf16.mxu0 0
    %119 = vmatpush1.bf16.msra.mxu0 0
    %120 = vmatprep.subr.bf16.mxu0 0
    %121 = vmatpush1.bf16.msra.mxu0 0
    %122 = vmatprep.subr.bf16.mxu0 0
    %123 = vmatpush1.bf16.msra.mxu0 0
    %124 = vmatprep.subr.bf16.mxu0 0
    %125 = vmatpush1.bf16.msra.mxu0 0
    %126 = vmatprep.subr.bf16.mxu0 0
    %127 = vmatpush1.bf16.msra.mxu0 0
    %128 = vmatprep.subr.bf16.mxu0 0
    %129 = vmatpush1.bf16.msra.mxu0 0
    %130 = vmatprep.subr.bf16.mxu0 0
    %131 = vmatpush1.bf16.msra.mxu0 0
    %132 = vmatprep.subr.bf16.mxu0 0
    %133 = vmatpush1.bf16.msra.mxu0 0
    %134 = vmatprep.subr.bf16.mxu0 0
    %135 = vmatpush1.bf16.msra.mxu0 0
    %136 = vmatprep.subr.bf16.mxu0 0
    %137 = vmatpush1.bf16.msra.mxu0 0
    %138 = vmatprep.subr.bf16.mxu0 0
    %139 = vmatpush1.bf16.msra.mxu0 0
    %140 = vmatprep.subr.bf16.mxu0 0
    %141 = vmatpush1.bf16.msra.mxu0 0
    %142 = vmatprep.mubr.bf16.mxu0 0
    %143 = vmatmul.mubr.bf16.gmra.mrb[0].mxu0 %v101
    %v144 = vpop.f32.mrb[0].mxu0
    %v145 = vadd.f32 0.0, %v144
    %v146 = vpop.f32.mrb[0].mxu0
    %v147 = vadd.f32 0.0, %v146
    %v148 = vpop.f32.mrb[0].mxu0
    %v149 = vpop.f32.mrb[0].mxu0
    %150 = vdwg.mxu0
    %v154 = vunpack.c.l.b16 %v90
    %v155 = vunpack.c.h.b16 %v90
    %v156 = vunpack.c.l.b16 %v91
    %v157 = vunpack.c.h.b16 %v91
    %v158 = vunpack.c.l.b16 %v92
    %v159 = vunpack.c.h.b16 %v92
    %v160 = vpack.c.b16 %v156, %v154
    %v161 = vpack.c.b16 %v157, %v155
    %v162 = vpack.c.b16 %v158, %v158
    %v163 = vpack.c.b16 %v159, %v159
    %vm166 = vcmask 195584
    %v168 = vsel %vm166, %v87, 0
    %v171 = vsel %vm103, %v162, 0
    %v174 = vsel %vm103, %v163, 0
    %176 = vmatprep.subr.bf16.mxu0 %v161
    %177 = vmatpush1.bf16.msra.mxu0 %v160
    %178 = vmatprep.subr.bf16.mxu0 %v174
    %179 = vmatpush1.bf16.msra.mxu0 %v171
    %180 = vmatprep.subr.bf16.mxu0 0
    %181 = vmatpush1.bf16.msra.mxu0 0
    %182 = vmatprep.subr.bf16.mxu0 0
    %183 = vmatpush1.bf16.msra.mxu0 0
    %184 = vmatprep.subr.bf16.mxu0 0
    %185 = vmatpush1.bf16.msra.mxu0 0
    %186 = vmatprep.subr.bf16.mxu0 0
    %187 = vmatpush1.bf16.msra.mxu0 0
    %188 = vmatprep.subr.bf16.mxu0 0
    %189 = vmatpush1.bf16.msra.mxu0 0
    %190 = vmatprep.subr.bf16.mxu0 0
    %191 = vmatpush1.bf16.msra.mxu0 0
    %192 = vmatprep.subr.bf16.mxu0 0
    %193 = vmatpush1.bf16.msra.mxu0 0
    %194 = vmatprep.subr.bf16.mxu0 0
    %195 = vmatpush1.bf16.msra.mxu0 0
    %196 = vmatprep.subr.bf16.mxu0 0
    %197 = vmatpush1.bf16.msra.mxu0 0
    %198 = vmatprep.subr.bf16.mxu0 0
    %199 = vmatpush1.bf16.msra.mxu0 0
    %200 = vmatprep.subr.bf16.mxu0 0
    %201 = vmatpush1.bf16.msra.mxu0 0
    %202 = vmatprep.subr.bf16.mxu0 0
    %203 = vmatpush1.bf16.msra.mxu0 0
    %204 = vmatprep.subr.bf16.mxu0 0
    %205 = vmatpush1.bf16.msra.mxu0 0
    %206 = vmatprep.subr.bf16.mxu0 0
    %207 = vmatpush1.bf16.msra.mxu0 0
    %208 = vmatprep.mubr.bf16.mxu0 0
    %209 = vmatmul.mubr.bf16.gmra.mrb[0].mxu0 %v168
    %v210 = vpop.f32.mrb[0].mxu0
    %v211 = vadd.f32 %v145, %v210
    %v212 = vpop.f32.mrb[0].mxu0
    %v213 = vadd.f32 %v147, %v212
    %v214 = vpop.f32.mrb[0].mxu0
    %v215 = vpop.f32.mrb[0].mxu0
    %216 = vdwg.mxu0
    %v217 = vld [vmem:[%s4] sm:$0x3]
    %v219 = vlaneseq
    %v220 = vshrl.u32 %v219, 7
    %v221 = vsub.s32 0, %v220
    %v222 = vrot.slane %v217, %v221
    %v223 = vlaneseq
    %v224 = vshrl.u32 %v223, 7
    %v225 = vsub.s32 1, %v224
    %v226 = vrot.slane %v217, %v225
    %v229 = vadd.f32 %v211, %v222
    %v230 = vadd.f32 %v213, %v226
    %v231 = vmax.f32 %v229, 0.0
    %v232 = vmax.f32 %v230, 0.0
    %v233 = vpack.c.bf16 %v231, %v231
    %v234 = vpack.c.bf16 %v232, %v232
    %v235 = vld [vmem:[#allocation8] sm:$0xff]
    %v236 = vld [vmem:[#allocation8 + $0x8] sm:$0xff]
    %v237 = vld [vmem:[#allocation8 + $0x10] sm:$0xff]
    %v238 = vld [vmem:[#allocation8 + $0x18] sm:$0xff]
    %v239 = vld [vmem:[#allocation8 + $0x20] sm:$0xff]
    %v240 = vld [vmem:[#allocation8 + $0x28] sm:$0xff]
    %v241 = vld [vmem:[#allocation8 + $0x30] sm:$0xff]
    %v242 = vld [vmem:[#allocation8 + $0x38] sm:$0xff]
    %v243 = vld [vmem:[#allocation8 + $0x40] sm:$0xff]
    %v244 = vld [vmem:[#allocation8 + $0x48] sm:$0xff]
    %v245 = vld [vmem:[#allocation8 + $0x50] sm:$0xff]
    %v246 = vld [vmem:[#allocation8 + $0x58] sm:$0xff]
    %v247 = vld [vmem:[#allocation8 + $0x60] sm:$0xff]
    %v248 = vld [vmem:[#allocation8 + $0x68] sm:$0xff]
    %v249 = vld [vmem:[#allocation8 + $0x70] sm:$0xff]
    %v250 = vld [vmem:[#allocation8 + $0x78] sm:$0xff]
    %v251 = vld [vmem:[#allocation8 + $0x80] sm:$0xff]
    %v252 = vld [vmem:[#allocation8 + $0x88] sm:$0xff]
    %v253 = vld [vmem:[#allocation8 + $0x90] sm:$0xff]
    %v254 = vld [vmem:[#allocation8 + $0x98] sm:$0xff]
    %v255 = vld [vmem:[#allocation8 + $0xa0] sm:$0xff]
    %v256 = vld [vmem:[#allocation8 + $0xa8] sm:$0xff]
    %v257 = vld [vmem:[#allocation8 + $0xb0] sm:$0xff]
    %v258 = vld [vmem:[#allocation8 + $0xb8] sm:$0xff]
    %v259 = vld [vmem:[#allocation8 + $0xc0] sm:$0xff]
    %v260 = vld [vmem:[#allocation8 + $0xc8] sm:$0xff]
    %v261 = vld [vmem:[#allocation8 + $0xd0] sm:$0xff]
    %v262 = vld [vmem:[#allocation8 + $0xd8] sm:$0xff]
    %v263 = vld [vmem:[#allocation8 + $0xe0] sm:$0xff]
    %v264 = vld [vmem:[#allocation8 + $0xe8] sm:$0xff]
    %v265 = vld [vmem:[#allocation8 + $0xf0] sm:$0xff]
    %v266 = vld [vmem:[#allocation8 + $0xf8] sm:$0xff]
    %v267 = vld [vmem:[%s6] sm:$0x3]
    %v269 = vlaneseq
    %v270 = vshrl.u32 %v269, 7
    %v271 = vsub.s32 0, %v270
    %v272 = vrot.slane %v267, %v271
    %v273 = vlaneseq
    %v274 = vshrl.u32 %v273, 7
    %v275 = vsub.s32 1, %v274
    %v276 = vrot.slane %v267, %v275
    %v311 = vunpack.c.l.b16 %v235
    %v312 = vunpack.c.h.b16 %v235
    %v313 = vunpack.c.l.b16 %v236
    %v314 = vunpack.c.h.b16 %v236
    %v315 = vunpack.c.l.b16 %v237
    %v316 = vunpack.c.h.b16 %v237
    %v317 = vunpack.c.l.b16 %v238
    %v318 = vunpack.c.h.b16 %v238
    %v319 = vunpack.c.l.b16 %v239
    %v320 = vunpack.c.h.b16 %v239
    %v321 = vunpack.c.l.b16 %v240
    %v322 = vunpack.c.h.b16 %v240
    %v323 = vunpack.c.l.b16 %v241
    %v324 = vunpack.c.h.b16 %v241
    %v325 = vunpack.c.l.b16 %v242
    %v326 = vunpack.c.h.b16 %v242
    %v327 = vunpack.c.l.b16 %v243
    %v328 = vunpack.c.h.b16 %v243
    %v329 = vunpack.c.l.b16 %v244
    %v330 = vunpack.c.h.b16 %v244
    %v331 = vunpack.c.l.b16 %v245
    %v332 = vunpack.c.h.b16 %v245
    %v333 = vunpack.c.l.b16 %v246
    %v334 = vunpack.c.h.b16 %v246
    %v335 = vunpack.c.l.b16 %v247
    %v336 = vunpack.c.h.b16 %v247
    %v337 = vunpack.c.l.b16 %v248
    %v338 = vunpack.c.h.b16 %v248
    %v339 = vunpack.c.l.b16 %v249
    %v340 = vunpack.c.h.b16 %v249
    %v341 = vunpack.c.l.b16 %v250
    %v342 = vunpack.c.h.b16 %v250
    %v343 = vunpack.c.l.b16 %v251
    %v344 = vunpack.c.h.b16 %v251
    %v345 = vunpack.c.l.b16 %v252
    %v346 = vunpack.c.h.b16 %v252
    %v347 = vunpack.c.l.b16 %v253
    %v348 = vunpack.c.h.b16 %v253
    %v349 = vunpack.c.l.b16 %v254
    %v350 = vunpack.c.h.b16 %v254
    %v351 = vunpack.c.l.b16 %v255
    %v352 = vunpack.c.h.b16 %v255
    %v353 = vunpack.c.l.b16 %v256
    %v354 = vunpack.c.h.b16 %v256
    %v355 = vunpack.c.l.b16 %v257
    %v356 = vunpack.c.h.b16 %v257
    %v357 = vunpack.c.l.b16 %v258
    %v358 = vunpack.c.h.b16 %v258
    %v359 = vunpack.c.l.b16 %v259
    %v360 = vunpack.c.h.b16 %v259
    %v361 = vunpack.c.l.b16 %v260
    %v362 = vunpack.c.h.b16 %v260
    %v363 = vunpack.c.l.b16 %v261
    %v364 = vunpack.c.h.b16 %v261
    %v365 = vunpack.c.l.b16 %v262
    %v366 = vunpack.c.h.b16 %v262
    %v367 = vunpack.c.l.b16 %v263
    %v368 = vunpack.c.h.b16 %v263
    %v369 = vunpack.c.l.b16 %v264
    %v370 = vunpack.c.h.b16 %v264
    %v371 = vunpack.c.l.b16 %v265
    %v372 = vunpack.c.h.b16 %v265
    %v373 = vunpack.c.l.b16 %v266
    %v374 = vunpack.c.h.b16 %v266
    %v375 = vpack.c.b16 %v313, %v311
    %v376 = vpack.c.b16 %v314, %v312
    %v377 = vpack.c.b16 %v317, %v315
    %v378 = vpack.c.b16 %v318, %v316
    %v379 = vpack.c.b16 %v321, %v319
    %v380 = vpack.c.b16 %v322, %v320
    %v381 = vpack.c.b16 %v325, %v323
    %v382 = vpack.c.b16 %v326, %v324
    %v383 = vpack.c.b16 %v329, %v327
    %v384 = vpack.c.b16 %v330, %v328
    %v385 = vpack.c.b16 %v333, %v331
    %v386 = vpack.c.b16 %v334, %v332
    %v387 = vpack.c.b16 %v337, %v335
    %v388 = vpack.c.b16 %v338, %v336
    %v389 = vpack.c.b16 %v341, %v339
    %v390 = vpack.c.b16 %v342, %v340
    %v391 = vpack.c.b16 %v345, %v343
    %v392 = vpack.c.b16 %v346, %v344
    %v393 = vpack.c.b16 %v349, %v347
    %v394 = vpack.c.b16 %v350, %v348
    %v395 = vpack.c.b16 %v353, %v351
    %v396 = vpack.c.b16 %v354, %v352
    %v397 = vpack.c.b16 %v357, %v355
    %v398 = vpack.c.b16 %v358, %v356
    %v399 = vpack.c.b16 %v361, %v359
    %v400 = vpack.c.b16 %v362, %v360
    %v401 = vpack.c.b16 %v365, %v363
    %v402 = vpack.c.b16 %v366, %v364
    %v403 = vpack.c.b16 %v369, %v367
    %v404 = vpack.c.b16 %v370, %v368
    %v405 = vpack.c.b16 %v373, %v371
    %v406 = vpack.c.b16 %v374, %v372
    %439 = vmatprep.subr.bf16.mxu0 %v376
    %440 = vmatpush1.bf16.msra.mxu0 %v375
    %441 = vmatprep.subr.bf16.mxu0 %v378
    %442 = vmatpush1.bf16.msra.mxu0 %v377
    %443 = vmatprep.subr.bf16.mxu0 %v380
    %444 = vmatpush1.bf16.msra.mxu0 %v379
    %445 = vmatprep.subr.bf16.mxu0 %v382
    %446 = vmatpush1.bf16.msra.mxu0 %v381
    %447 = vmatprep.subr.bf16.mxu0 %v384
    %448 = vmatpush1.bf16.msra.mxu0 %v383
    %449 = vmatprep.subr.bf16.mxu0 %v386
    %450 = vmatpush1.bf16.msra.mxu0 %v385
    %451 = vmatprep.subr.bf16.mxu0 %v388
    %452 = vmatpush1.bf16.msra.mxu0 %v387
    %453 = vmatprep.subr.bf16.mxu0 %v390
    %454 = vmatpush1.bf16.msra.mxu0 %v389
    %455 = vmatprep.subr.bf16.mxu0 %v392
    %456 = vmatpush1.bf16.msra.mxu0 %v391
    %457 = vmatprep.subr.bf16.mxu0 %v394
    %458 = vmatpush1.bf16.msra.mxu0 %v393
    %459 = vmatprep.subr.bf16.mxu0 %v396
    %460 = vmatpush1.bf16.msra.mxu0 %v395
    %461 = vmatprep.subr.bf16.mxu0 %v398
    %462 = vmatpush1.bf16.msra.mxu0 %v397
    %463 = vmatprep.subr.bf16.mxu0 %v400
    %464 = vmatpush1.bf16.msra.mxu0 %v399
    %465 = vmatprep.subr.bf16.mxu0 %v402
    %466 = vmatpush1.bf16.msra.mxu0 %v401
    %467 = vmatprep.subr.bf16.mxu0 %v404
    %468 = vmatpush1.bf16.msra.mxu0 %v403
    %469 = vmatprep.subr.bf16.mxu0 %v406
    %470 = vmatpush1.bf16.msra.mxu0 %v405
    %471 = vmatprep.mubr.bf16.mxu0 %v234
    %472 = vmatmul.mubr.bf16.gmra.mrb[0].mxu0 %v233
    %v473 = vpop.f32.mrb[0].mxu0
    %v474 = vadd.f32 %v272, %v473
    %v475 = vpop.f32.mrb[0].mxu0
    %v476 = vadd.f32 %v276, %v475
    %v477 = vpop.f32.mrb[0].mxu0
    %v478 = vpop.f32.mrb[0].mxu0
    %479 = vdwg.mxu0
    %v480 = vmax.f32 %v474, 0.0
    %v481 = vmax.f32 %v476, 0.0
    %v482 = vld [vmem:[%s7] sm:$0x3]
    %v484 = vlaneseq
    %v485 = vshrl.u32 %v484, 7
    %v486 = vsub.s32 0, %v485
    %v487 = vrot.slane %v482, %v486
    %v488 = vlaneseq
    %v489 = vshrl.u32 %v488, 7
    %v490 = vsub.s32 1, %v489
    %v491 = vrot.slane %v482, %v490
    %v494 = vmul.f32 %v480, %v487
    %v495 = vmul.f32 %v481, %v491
    %v496 = vadd.f32 %v494, %v495
    %497 = vadd.xlane.f32.xlu0 %v496
    %v498 = vpop.xlane.xlu0 %497
    %v499 = vld [vmem:[#allocation2] sm:$0x1]
    %v501 = vlaneseq
    %v502 = vshrl.u32 %v501, 7
    %v503 = vsub.s32 0, %v502
    %v504 = vrot.slane %v499, %v503
    %v506 = vadd.f32 %v498, %v504
    %vm507 = vcmask 7168
    %508 = vst.msk [vmem:[%s9] sm:$0xff] %vm507, %v506
    // Predicated region
    $region54: #{tpu_custom_call.1} parent=1 // pred_check
      _
    $region55: #{tpu_custom_call.1} parent=1 // pred_check_branch
      %510 = sbr.rel (0) target = $region57
    $region56: #{tpu_custom_call.1} parent=1 // pred_region
      _
    $region57: #{tpu_custom_call.1} parent=1 // pred_fallthru
      _
    // Predicated region
    $region58: #{tpu_custom_call.1} parent=1 // pred_check
      _
    $region59: #{tpu_custom_call.1} parent=1 // pred_check_branch
      %512 = sbr.rel (0) target = $region61
    $region60: #{tpu_custom_call.1} parent=1 // pred_region
      _
    $region61: #{tpu_custom_call.1} parent=1 // pred_fallthru
      _
    %513 = vsyncpa [#allocation4], 1
    %514 = vsyncpa [#allocation6], 1
    %515 = vsyncpa [#allocation9], 1

</llo_original>
